<compile_context>
chip_gen: v7x
topology: tpu7x:2x2x1
jax: 0.10.0
libtpu: 0.0.40
codegen_flags: <defaults>
</compile_context>

<pallas_src>
import functools

import jax
import jax.numpy as jnp
from jax.experimental import pallas as pl
from jax.experimental.pallas import tpu as pltpu

HIDDEN_1 = 400
HIDDEN_2 = 300

_LANE = 128
_SUBLANE = 8


def _round_up(x, m):
    return (x + m - 1) // m * m


@functools.lru_cache(maxsize=1)
def _batch_tile_cap():
    """Max batch-tile rows: 512 on v6e/v7x, 256 on older chips (v5e has a
    single vector-store slot and no bf16 VALU, so wide f32 intermediates can
    pin the store slot past 256 rows)."""
    try:
        kind = jax.devices()[0].device_kind.lower()
    except Exception:
        return 256
    if any(v in kind for v in ("v2", "v3", "v4", "v5")):
        return 256
    return 512


def _pick_batch_tile(batch):
    """Batch-tile rows.

    Small batches (latency path): one sublane-aligned tile.
    Otherwise: the largest MXU-friendly tile (multiple of 256 when possible,
    capped per-chip) that still leaves >= 2 grid steps so v7x can shard the
    "parallel" batch axis across its two TensorCores (no-op on v5e/v6e).
    """
    if batch <= _SUBLANE:
        return _round_up(batch, _SUBLANE)
    cap = _batch_tile_cap()
    half = _round_up((batch + 1) // 2, _SUBLANE)  # biggest tile giving >=2 steps
    for cand in (512, 256, 128):
        if cand <= cap and cand <= half:
            return cand
    return min(half, cap)


def _actor_kernel(s_ref, w1_ref, b1_ref, w2_ref, b2_ref, w3_ref, b3_ref,
                  amax_ref, out_ref):
    """Fused 3-layer MLP: relu(xW1+b1) -> relu(.W2+b2) -> tanh(.W3+b3)*amax."""
    amax = amax_ref[0, 0]                                   # SMEM scalar

    # Layer 1: (TB, S)bf16 @ (S, 512)bf16 -> f32 acc, +bias, relu.
    x = s_ref[...].astype(jnp.bfloat16)
    h1 = jnp.dot(x, w1_ref[...], preferred_element_type=jnp.float32) + b1_ref[...]
    h1 = jnp.maximum(h1, 0.0)

    # Layer 2: (TB, 512) @ (512, 384) -> f32 acc, +bias, relu.
    h2 = jnp.dot(h1.astype(jnp.bfloat16), w2_ref[...],
                 preferred_element_type=jnp.float32) + b2_ref[...]
    h2 = jnp.maximum(h2, 0.0)

    # Layer 3: (TB, 384) @ (384, 128) -> f32 acc, +bias, tanh, scale.
    a = jnp.dot(h2.astype(jnp.bfloat16), w3_ref[...],
                preferred_element_type=jnp.float32) + b3_ref[...]
    out_ref[...] = (jnp.tanh(a) * amax).astype(out_ref.dtype)


def prepare_params(params):
    """One-time parameter prep (hoisted off the per-step hot path).

    - Transpose PyTorch (out, in) weights to (in, out).
    - Zero-pad feature dims to multiples of 128 lanes (exact with ReLU: padded
      bias columns are 0 and padded rows of the next weight are 0).
    - Cast weights to bf16 (MXU-native, halves weight DMA bytes); biases f32.
    """
    def pad_cols(a, cols):
        p = cols - a.shape[1]
        return jnp.pad(a, ((0, 0), (0, p))) if p else a

    def pad_rows(a, rows):
        p = rows - a.shape[0]
        return jnp.pad(a, ((0, p), (0, 0))) if p else a

    action_dim = params["w3"].shape[0]
    h1p = _round_up(HIDDEN_1, _LANE)        # 512
    h2p = _round_up(HIDDEN_2, _LANE)        # 384
    adp = _round_up(action_dim, _LANE)      # 128 for small action_dim

    w1 = pad_cols(params["w1"].T.astype(jnp.float32), h1p)
    w2 = pad_cols(pad_rows(params["w2"].T.astype(jnp.float32), h1p), h2p)
    w3 = pad_cols(pad_rows(params["w3"].T.astype(jnp.float32), h2p), adp)
    b1 = pad_cols(params["b1"].reshape(1, -1).astype(jnp.float32), h1p)
    b2 = pad_cols(params["b2"].reshape(1, -1).astype(jnp.float32), h2p)
    b3 = pad_cols(params["b3"].reshape(1, -1).astype(jnp.float32), adp)

    return {
        "w1": w1.astype(jnp.bfloat16), "b1": b1,
        "w2": w2.astype(jnp.bfloat16), "b2": b2,
        "w3": w3.astype(jnp.bfloat16), "b3": b3,
    }


@functools.partial(
    jax.jit, static_argnames=("action_dim", "out_dtype", "return_padded"))
def actor_forward(state, prepped, action_max, action_dim,
                  out_dtype=jnp.float32, return_padded=False):
    """state: (B, state_dim) f32.  prepped: output of prepare_params().

    Returns (B, action_dim) actions in `out_dtype`, or the padded
    (B_pad, 128) slab if return_padded=True (rows >= B / cols >= action_dim
    are padding; skips the post-kernel slice copy for throughput consumers).
    """
    B, S = state.shape
    h1p = prepped["w1"].shape[1]
    h2p = prepped["w2"].shape[1]
    adp = prepped["w3"].shape[1]

    # Pad batch to the chosen tile; tile it with a 1-D grid.  Weight/bias
    # blocks use constant index_maps -> fetched once and VMEM-resident across
    # all batch tiles while state/output tiles pipeline.  (Their default
    # double-buffering wastes ~0.6 MiB VMEM; harmless at these sizes.)
    tb = _pick_batch_tile(B)
    bp = _round_up(B, tb)
    if bp != B:
        state = jnp.pad(state, ((0, bp - B), (0, 0)))
    grid = (bp // tb,)

    amax = jnp.asarray(action_max, jnp.float32).reshape(1, 1)

    out = pl.pallas_call(
        _actor_kernel,
        out_shape=jax.ShapeDtypeStruct((bp, adp), out_dtype),
        grid=grid,
        in_specs=[
            pl.BlockSpec((tb, S), lambda i: (i, 0)),          # state tile
            pl.BlockSpec((S, h1p), lambda i: (0, 0)),         # W1 (resident)
            pl.BlockSpec((1, h1p), lambda i: (0, 0)),         # b1
            pl.BlockSpec((h1p, h2p), lambda i: (0, 0)),       # W2 (resident)
            pl.BlockSpec((1, h2p), lambda i: (0, 0)),         # b2
            pl.BlockSpec((h2p, adp), lambda i: (0, 0)),       # W3 (resident)
            pl.BlockSpec((1, adp), lambda i: (0, 0)),         # b3
            pl.BlockSpec((1, 1), lambda i: (0, 0),
                         memory_space=pltpu.MemorySpace.SMEM),  # action_max
        ],
        out_specs=pl.BlockSpec((tb, adp), lambda i: (i, 0)),
        compiler_params=pltpu.CompilerParams(
            dimension_semantics=("parallel",)),   # v7x: batch over both TCs
    )(state, prepped["w1"], prepped["b1"], prepped["w2"], prepped["b2"],
      prepped["w3"], prepped["b3"], amax)

    if return_padded:
        return out
    return out[:B, :action_dim]


def init_params(key, state_dim, action_dim):
    """Deterministic synthetic parameters, PyTorch Linear layout (out, in)."""
    ks = jax.random.split(key, 6)

    def u(k, shape, fan_in):
        bound = 1.0 / jnp.sqrt(fan_in)
        return jax.random.uniform(k, shape, jnp.float32, -bound, bound)

    return {
        "w1": u(ks[0], (HIDDEN_1, state_dim), state_dim),
        "b1": u(ks[1], (HIDDEN_1,), state_dim),
        "w2": u(ks[2], (HIDDEN_2, HIDDEN_1), HIDDEN_1),
        "b2": u(ks[3], (HIDDEN_2,), HIDDEN_1),
        "w3": u(ks[4], (action_dim, HIDDEN_2), HIDDEN_2),
        "b3": u(ks[5], (action_dim,), HIDDEN_2),
    }


if __name__ == "__main__":
    key = jax.random.PRNGKey(0)
    k_state, k_big, k_params = jax.random.split(key, 3)

    batch = 2
    state_dim = 16
    action_dim = 8
    action_max = 2.0

    state = jax.random.normal(k_state, (batch, state_dim), jnp.float32)
    params = init_params(k_params, state_dim, action_dim)
    prepped = prepare_params(params)          # one-time, off the hot path

    # Reference 1 (tight): pure-JAX emulation of the kernel's bf16-weight /
    # f32-accumulate math on the same prepped (padded) parameters.
    def bf16_ref(x):
        def layer(v, w_bf16, b):
            return jnp.dot(v.astype(jnp.bfloat16).astype(jnp.float32),
                           w_bf16.astype(jnp.float32)) + b
        h1 = jnp.maximum(layer(x, prepped["w1"], prepped["b1"]), 0.0)
        h2 = jnp.maximum(layer(h1, prepped["w2"], prepped["b2"]), 0.0)
        a = jnp.tanh(layer(h2, prepped["w3"], prepped["b3"])) * action_max
        return a[:, :action_dim]

    # Reference 2 (loose): exact f32 PyTorch-semantics forward.
    def f32_ref(x):
        h1 = jnp.maximum(x @ params["w1"].T + params["b1"], 0.0)
        h2 = jnp.maximum(h1 @ params["w2"].T + params["b2"], 0.0)
        return jnp.tanh(h2 @ params["w3"].T + params["b3"]) * action_max

    # --- small-batch latency path (single tile, grid=(1,)) ---
    action = actor_forward(state, prepped, action_max, action_dim)
    action = jax.block_until_ready(action)
    assert action.shape == (batch, action_dim)
    assert action.dtype == jnp.float32
    assert jnp.allclose(action, bf16_ref(state), atol=2e-3, rtol=2e-3)
    assert jnp.allclose(action, f32_ref(state), atol=5e-2, rtol=5e-2)

    # --- throughput path: ragged large batch, multi-tile "parallel" grid ---
    big = 600                                  # -> tb=256 (or 504/256 on v5e)
    state_big = jax.random.normal(k_big, (big, state_dim), jnp.float32)

    act_big = actor_forward(state_big, prepped, action_max, action_dim)
    act_big = jax.block_until_ready(act_big)
    assert act_big.shape == (big, action_dim)
    assert jnp.allclose(act_big, bf16_ref(state_big), atol=2e-3, rtol=2e-3)

    # bf16-output variant (halves output-side HBM traffic).
    act_big_bf16 = actor_forward(state_big, prepped, action_max, action_dim,
                                 out_dtype=jnp.bfloat16)
    act_big_bf16 = jax.block_until_ready(act_big_bf16)
    assert act_big_bf16.dtype == jnp.bfloat16
    assert jnp.allclose(act_big_bf16.astype(jnp.float32), f32_ref(state_big),
                        atol=5e-2, rtol=5e-2)

    print("KERNEL_OK")
</pallas_src>

<mosaic_0001>
module attributes {stable_mosaic.version = 11 : i64} {
  func.func @_actor_kernel(%arg0: i32, %arg1: memref<8x16xf32, #tpu.memory_space<vmem>>, %arg2: memref<16x512xbf16, #tpu.memory_space<vmem>>, %arg3: memref<1x512xf32, #tpu.memory_space<vmem>>, %arg4: memref<512x384xbf16, #tpu.memory_space<vmem>>, %arg5: memref<1x384xf32, #tpu.memory_space<vmem>>, %arg6: memref<384x128xbf16, #tpu.memory_space<vmem>>, %arg7: memref<1x128xf32, #tpu.memory_space<vmem>>, %arg8: memref<1x1xf32, #tpu.memory_space<smem>>, %arg9: memref<8x128xf32, #tpu.memory_space<vmem>>) attributes {dimension_semantics = [#tpu.dimension_semantics<parallel>], iteration_bounds = array<i64: 1>, scalar_prefetch = 0 : i64, scratch_operands = 0 : i64, tpu.core_type = #tpu.core_type<tc>, window_params = [{transform_indices = @transform_0, window_bounds = array<i64: 8, 16>}, {pipeline_mode = #tpu.pipeline_mode<synchronous>, transform_indices = @transform_1, window_bounds = array<i64: 16, 512>}, {pipeline_mode = #tpu.pipeline_mode<synchronous>, transform_indices = @transform_2, window_bounds = array<i64: 1, 512>}, {pipeline_mode = #tpu.pipeline_mode<synchronous>, transform_indices = @transform_3, window_bounds = array<i64: 512, 384>}, {pipeline_mode = #tpu.pipeline_mode<synchronous>, transform_indices = @transform_4, window_bounds = array<i64: 1, 384>}, {pipeline_mode = #tpu.pipeline_mode<synchronous>, transform_indices = @transform_5, window_bounds = array<i64: 384, 128>}, {pipeline_mode = #tpu.pipeline_mode<synchronous>, transform_indices = @transform_6, window_bounds = array<i64: 1, 128>}, {transform_indices = @transform_7, window_bounds = array<i64: 1, 1>}, {transform_indices = @transform_8, window_bounds = array<i64: 8, 128>}]} {
    %c0 = arith.constant 0 : index
    %c0_0 = arith.constant 0 : index
    %0 = memref.load %arg8[%c0, %c0_0] : memref<1x1xf32, #tpu.memory_space<smem>>
    %c0_1 = arith.constant 0 : index
    %c0_2 = arith.constant 0 : index
    %1 = vector.load %arg1[%c0_1, %c0_2] : memref<8x16xf32, #tpu.memory_space<vmem>>, vector<8x16xf32>
    %2 = arith.truncf %1 : vector<8x16xf32> to vector<8x16xbf16>
    %c0_3 = arith.constant 0 : index
    %c0_4 = arith.constant 0 : index
    %3 = vector.load %arg2[%c0_3, %c0_4] : memref<16x512xbf16, #tpu.memory_space<vmem>>, vector<16x512xbf16>
    %cst = arith.constant dense<0.000000e+00> : vector<8x512xf32>
    %4 = tpu.matmul %2, %3, %cst {dimension_numbers = #tpu.dot_dimension_numbers<[1], [0], [0], [1], [0, 0, 1, 1], [], []>} : vector<8x16xbf16>, vector<16x512xbf16>, vector<8x512xf32> -> vector<8x512xf32>
    %c0_5 = arith.constant 0 : index
    %c0_6 = arith.constant 0 : index
    %5 = vector.load %arg3[%c0_5, %c0_6] : memref<1x512xf32, #tpu.memory_space<vmem>>, vector<1x512xf32>
    %6 = vector.broadcast %5 : vector<1x512xf32> to vector<8x512xf32>
    %7 = arith.addf %4, %6 : vector<8x512xf32>
    %cst_7 = arith.constant 0.000000e+00 : f32
    %8 = vector.broadcast %cst_7 : f32 to vector<8x512xf32>
    %9 = arith.maximumf %7, %8 : vector<8x512xf32>
    %10 = arith.truncf %9 : vector<8x512xf32> to vector<8x512xbf16>
    %c0_8 = arith.constant 0 : index
    %c0_9 = arith.constant 0 : index
    %11 = vector.load %arg4[%c0_8, %c0_9] : memref<512x384xbf16, #tpu.memory_space<vmem>>, vector<512x384xbf16>
    %cst_10 = arith.constant dense<0.000000e+00> : vector<8x384xf32>
    %12 = tpu.matmul %10, %11, %cst_10 {dimension_numbers = #tpu.dot_dimension_numbers<[1], [0], [0], [1], [0, 0, 1, 1], [], []>} : vector<8x512xbf16>, vector<512x384xbf16>, vector<8x384xf32> -> vector<8x384xf32>
    %c0_11 = arith.constant 0 : index
    %c0_12 = arith.constant 0 : index
    %13 = vector.load %arg5[%c0_11, %c0_12] : memref<1x384xf32, #tpu.memory_space<vmem>>, vector<1x384xf32>
    %14 = vector.broadcast %13 : vector<1x384xf32> to vector<8x384xf32>
    %15 = arith.addf %12, %14 : vector<8x384xf32>
    %cst_13 = arith.constant 0.000000e+00 : f32
    %16 = vector.broadcast %cst_13 : f32 to vector<8x384xf32>
    %17 = arith.maximumf %15, %16 : vector<8x384xf32>
    %18 = arith.truncf %17 : vector<8x384xf32> to vector<8x384xbf16>
    %c0_14 = arith.constant 0 : index
    %c0_15 = arith.constant 0 : index
    %19 = vector.load %arg6[%c0_14, %c0_15] : memref<384x128xbf16, #tpu.memory_space<vmem>>, vector<384x128xbf16>
    %cst_16 = arith.constant dense<0.000000e+00> : vector<8x128xf32>
    %20 = tpu.matmul %18, %19, %cst_16 {dimension_numbers = #tpu.dot_dimension_numbers<[1], [0], [0], [1], [0, 0, 1, 1], [], []>} : vector<8x384xbf16>, vector<384x128xbf16>, vector<8x128xf32> -> vector<8x128xf32>
    %c0_17 = arith.constant 0 : index
    %c0_18 = arith.constant 0 : index
    %21 = vector.load %arg7[%c0_17, %c0_18] : memref<1x128xf32, #tpu.memory_space<vmem>>, vector<1x128xf32>
    %22 = vector.broadcast %21 : vector<1x128xf32> to vector<8x128xf32>
    %23 = arith.addf %20, %22 : vector<8x128xf32>
    %24 = math.tanh %23 : vector<8x128xf32>
    %25 = vector.broadcast %0 : f32 to vector<8x128xf32>
    %26 = arith.mulf %24, %25 : vector<8x128xf32>
    %c0_19 = arith.constant 0 : index
    %c0_20 = arith.constant 0 : index
    %27 = vector.load %arg9[%c0_19, %c0_20] : memref<8x128xf32, #tpu.memory_space<vmem>>, vector<8x128xf32>
    tpu.vector_store %arg9[%c0_19, %c0_20], %26 {strides = array<i32>} : memref<8x128xf32, #tpu.memory_space<vmem>>, vector<8x128xf32>,
    return
  }
  func.func @transform_0(%arg0: i32) -> (i32, i32) {
    %c0_i32 = arith.constant 0 : i32
    %c0_i32_0 = arith.constant 0 : i32
    return %arg0, %c0_i32 : i32, i32
  }
  func.func @transform_1(%arg0: i32) -> (i32, i32) {
    %c0_i32 = arith.constant 0 : i32
    %c0_i32_0 = arith.constant 0 : i32
    %c0_i32_1 = arith.constant 0 : i32
    return %c0_i32, %c0_i32_0 : i32, i32
  }
  func.func @transform_2(%arg0: i32) -> (i32, i32) {
    %c0_i32 = arith.constant 0 : i32
    %c0_i32_0 = arith.constant 0 : i32
    %c0_i32_1 = arith.constant 0 : i32
    return %c0_i32, %c0_i32_0 : i32, i32
  }
  func.func @transform_3(%arg0: i32) -> (i32, i32) {
    %c0_i32 = arith.constant 0 : i32
    %c0_i32_0 = arith.constant 0 : i32
    %c0_i32_1 = arith.constant 0 : i32
    return %c0_i32, %c0_i32_0 : i32, i32
  }
  func.func @transform_4(%arg0: i32) -> (i32, i32) {
    %c0_i32 = arith.constant 0 : i32
    %c0_i32_0 = arith.constant 0 : i32
    %c0_i32_1 = arith.constant 0 : i32
    return %c0_i32, %c0_i32_0 : i32, i32
  }
  func.func @transform_5(%arg0: i32) -> (i32, i32) {
    %c0_i32 = arith.constant 0 : i32
    %c0_i32_0 = arith.constant 0 : i32
    %c0_i32_1 = arith.constant 0 : i32
    return %c0_i32, %c0_i32_0 : i32, i32
  }
  func.func @transform_6(%arg0: i32) -> (i32, i32) {
    %c0_i32 = arith.constant 0 : i32
    %c0_i32_0 = arith.constant 0 : i32
    %c0_i32_1 = arith.constant 0 : i32
    return %c0_i32, %c0_i32_0 : i32, i32
  }
  func.func @transform_7(%arg0: i32) -> (i32, i32) {
    %c0_i32 = arith.constant 0 : i32
    %c0_i32_0 = arith.constant 0 : i32
    %c0_i32_1 = arith.constant 0 : i32
    return %c0_i32, %c0_i32_0 : i32, i32
  }
  func.func @transform_8(%arg0: i32) -> (i32, i32) {
    %c0_i32 = arith.constant 0 : i32
    %c0_i32_0 = arith.constant 0 : i32
    return %arg0, %c0_i32 : i32, i32
  }
}

</mosaic_0001>

<llo_original>
// kernel: actor_forward.1
$region0: #{actor_forward.1}
  #allocation0 [shape = 'u32[]', space=smem, size = 0x4, offset = 0x4, fixed_abs, tag = 'smem constant byte address 0x4 - core index']
  #allocation1 [shape = 'u32[144,128]{1,0:T(1,128)}', space=vmem, size = 0x12000, scoped, tag = 'internal scratch']
  #allocation2 [shape = 'f32[1,1]{1,0:T(1,128)S(6)}', space=smem, size = 0x200, scoped, tag = 'scoped memory for actor_forward.1']
  %s0 = inlined_call_operand.vmem [shape: f32[8,16], index: 0, kind: input, shape index: {}]
  %s1 = inlined_call_operand.vmem [shape: bf16[16,512], index: 1, kind: input, shape index: {}]
  %s2 = inlined_call_operand.hbm [shape: f32[1,512], index: 2, kind: input, shape index: {}]
  %s3 = inlined_call_operand.hbm [shape: bf16[512,384], index: 3, kind: input, shape index: {}]
  %s4 = inlined_call_operand.hbm [shape: f32[1,384], index: 4, kind: input, shape index: {}]
  %s5 = inlined_call_operand.hbm [shape: bf16[384,128], index: 5, kind: input, shape index: {}]
  %s6 = inlined_call_operand.vmem [shape: f32[1,128], index: 6, kind: input, shape index: {}]
  %s7 = inlined_call_operand.<no memory space> [shape: f32[1,1], index: 7, kind: input, shape index: {}]
  %s8 = inlined_call_operand.vmem [shape: f32[8,128], index: 8, kind: output, shape index: {}]
  %s9 = sld [smem:[#allocation0]]
  $region58: #{actor_forward.1} parent=0
    _
  %s11 = ssub.s32 1, %s9
  %s12 = scalar_select 0, %s11, %s9
  %13 = sst [smem:[#allocation2]] %s7
  $region1: #{actor_forward.1} parent=0
    #allocation3 [shape = 'u8[2048]{0}', space=vmem, size = 0x800, scoped, tag = 'input window, operand 2, single buffered']
    #allocation4 [shape = 's32[1]{0}', space=sflag, size = 0x4, scoped, tag = 'scoped memory for actor_forward.1']
    #allocation5 [shape = 'u8[393216]{0}', space=vmem, size = 0x60000, scoped, tag = 'input window, operand 3, single buffered']
    #allocation6 [shape = 's32[1]{0}', space=sflag, size = 0x4, scoped, tag = 'scoped memory for actor_forward.1']
    #allocation7 [shape = 'u8[1536]{0}', space=vmem, size = 0x800, scoped, tag = 'input window, operand 4, single buffered']
    #allocation8 [shape = 'u8[98304]{0}', space=vmem, size = 0x18000, scoped, tag = 'input window, operand 5, single buffered']
    #allocation9 [shape = 's32[1]{0}', space=sflag, size = 0x4, scoped, tag = 'scoped memory for actor_forward.1']
    %14 = vsyncpa [#allocation4], 0
    %15 = vsyncpa [#allocation6], 0
    %16 = vsyncpa [#allocation9], 0
    // Predicated region
    $region2: #{actor_forward.1} parent=1 // pred_check
      _
    $region3: #{actor_forward.1} parent=1 // pred_check_branch
      %18 = sbr.rel (0) target = $region5
    $region4: #{actor_forward.1} parent=1 // pred_region
      _
    $region5: #{actor_forward.1} parent=1 // pred_fallthru
      _
    // Predicated region
    $region6: #{actor_forward.1} parent=1 // pred_check
      _
    $region7: #{actor_forward.1} parent=1 // pred_check_branch
      %20 = sbr.rel (0) target = $region9
    $region8: #{actor_forward.1} parent=1 // pred_region
      _
    $region9: #{actor_forward.1} parent=1 // pred_fallthru
      _
    // Predicated region
    $region10: #{actor_forward.1} parent=1 // pred_check
      _
    $region11: #{actor_forward.1} parent=1 // pred_check_branch
      %22 = sbr.rel (0) target = $region13
    $region12: #{actor_forward.1} parent=1 // pred_region
      %s24 = ssub.s32 64, 64
      %25 = vsyncadd [#allocation4], %s24
      %s27 = sshll.u32 [#allocation3], 4
      %s28 = int_to_ptr.vmem [resolvable:$true] %s27
      %30 = dma.hbm_to_vmem [thread:$0]  %s2, 64, %s28, [#allocation4]
    $region13: #{actor_forward.1} parent=1 // pred_fallthru
      _
    // Predicated region
    $region14: #{actor_forward.1} parent=1 // pred_check
      _
    $region15: #{actor_forward.1} parent=1 // pred_check_branch
      %32 = sbr.rel (0) target = $region17
    $region16: #{actor_forward.1} parent=1 // pred_region
      %s34 = ssub.s32 12288, 12288
      %35 = vsyncadd [#allocation6], %s34
      %s36 = sshll.u32 [#allocation5], 4
      %s37 = int_to_ptr.vmem [resolvable:$true] %s36
      %42 = dma.hbm_to_vmem [thread:$0]  %s3, 12288, %s37, [#allocation6], 192, 192, 12
    $region17: #{actor_forward.1} parent=1 // pred_fallthru
      _
    // Predicated region
    $region18: #{actor_forward.1} parent=1 // pred_check
      _
    $region19: #{actor_forward.1} parent=1 // pred_check_branch
      %44 = sbr.rel (0) target = $region21
    $region20: #{actor_forward.1} parent=1 // pred_region
      %s46 = ssub.s32 48, 48
      %47 = vsyncadd [#allocation6], %s46
      %s49 = sshll.u32 [#allocation7], 4
      %s50 = int_to_ptr.vmem [resolvable:$true] %s49
      %52 = dma.hbm_to_vmem [thread:$0]  %s4, 48, %s50, [#allocation6]
    $region21: #{actor_forward.1} parent=1 // pred_fallthru
      _
    // Predicated region
    $region22: #{actor_forward.1} parent=1 // pred_check
      _
    $region23: #{actor_forward.1} parent=1 // pred_check_branch
      %54 = sbr.rel (0) target = $region25
    $region24: #{actor_forward.1} parent=1 // pred_region
      %s56 = ssub.s32 3072, 3072
      %57 = vsyncadd [#allocation9], %s56
      %s58 = sshll.u32 [#allocation8], 4
      %s59 = int_to_ptr.vmem [resolvable:$true] %s58
      %64 = dma.hbm_to_vmem [thread:$0]  %s5, 3072, %s59, [#allocation9], 64, 64, 4
    $region25: #{actor_forward.1} parent=1 // pred_fallthru
      _
    // Predicated region
    $region26: #{actor_forward.1} parent=1 // pred_check
      _
    $region27: #{actor_forward.1} parent=1 // pred_check_branch
      %66 = sbr.rel (0) target = $region29
    $region28: #{actor_forward.1} parent=1 // pred_region
      _
    $region29: #{actor_forward.1} parent=1 // pred_fallthru
      _
    // Predicated region
    $region30: #{actor_forward.1} parent=1 // pred_check
      _
    $region31: #{actor_forward.1} parent=1 // pred_check_branch
      %68 = sbr.rel (0) target = $region33
    $region32: #{actor_forward.1} parent=1 // pred_region
      _
    $region33: #{actor_forward.1} parent=1 // pred_fallthru
      _
    // Predicated region
    $region34: #{actor_forward.1} parent=1 // pred_check
      _
    $region35: #{actor_forward.1} parent=1 // pred_check_branch
      %70 = sbr.rel (0) target = $region37
    $region36: #{actor_forward.1} parent=1 // pred_region
      %71 = dma.done [#allocation4], 64
    $region37: #{actor_forward.1} parent=1 // pred_fallthru
      _
    // Predicated region
    $region38: #{actor_forward.1} parent=1 // pred_check
      _
    $region39: #{actor_forward.1} parent=1 // pred_check_branch
      %73 = sbr.rel (0) target = $region41
    $region40: #{actor_forward.1} parent=1 // pred_region
      %74 = dma.done [#allocation6], 12288
    $region41: #{actor_forward.1} parent=1 // pred_fallthru
      _
    // Predicated region
    $region42: #{actor_forward.1} parent=1 // pred_check
      _
    $region43: #{actor_forward.1} parent=1 // pred_check_branch
      %76 = sbr.rel (0) target = $region45
    $region44: #{actor_forward.1} parent=1 // pred_region
      %77 = dma.done [#allocation6], 48
    $region45: #{actor_forward.1} parent=1 // pred_fallthru
      _
    // Predicated region
    $region46: #{actor_forward.1} parent=1 // pred_check
      _
    $region47: #{actor_forward.1} parent=1 // pred_check_branch
      %79 = sbr.rel (0) target = $region49
    $region48: #{actor_forward.1} parent=1 // pred_region
      %80 = dma.done [#allocation9], 3072
    $region49: #{actor_forward.1} parent=1 // pred_fallthru
      _
    %s82 = sld [smem:[#allocation2]]
    %v83 = vld [vmem:[%s0] sm:$0xff]
    %v84 = vpack.c.bf16 %v83, %v83
    %v85 = vld [vmem:[%s1] sm:$0xff]
    %v86 = vld [vmem:[%s1 + $0x8] sm:$0xff]
    %v87 = vld [vmem:[%s1 + $0x10] sm:$0xff]
    %v88 = vld [vmem:[%s1 + $0x18] sm:$0xff]
    %v89 = vld [vmem:[#allocation3] sm:$0xf]
    %v91 = vlaneseq
    %v92 = vshrl.u32 %v91, 7
    %v93 = vsub.s32 0, %v92
    %v94 = vrot.slane %v89, %v93
    %v95 = vlaneseq
    %v96 = vshrl.u32 %v95, 7
    %v97 = vsub.s32 1, %v96
    %v98 = vrot.slane %v89, %v97
    %v99 = vlaneseq
    %v100 = vshrl.u32 %v99, 7
    %v101 = vsub.s32 2, %v100
    %v102 = vrot.slane %v89, %v101
    %v103 = vlaneseq
    %v104 = vshrl.u32 %v103, 7
    %v105 = vsub.s32 3, %v104
    %v106 = vrot.slane %v89, %v105
    %v115 = vunpack.c.l.b16 %v85
    %v116 = vunpack.c.h.b16 %v85
    %v117 = vunpack.c.l.b16 %v86
    %v118 = vunpack.c.h.b16 %v86
    %v119 = vunpack.c.l.b16 %v87
    %v120 = vunpack.c.h.b16 %v87
    %v121 = vunpack.c.l.b16 %v88
    %v122 = vunpack.c.h.b16 %v88
    %v123 = vpack.c.b16 %v119, %v115
    %v124 = vpack.c.b16 %v120, %v116
    %v125 = vpack.c.b16 %v121, %v117
    %v126 = vpack.c.b16 %v122, %v118
    %vm131 = vcmask 130048
    %v133 = vsel %vm131, %v84, 0
    %135 = vmatprep.subr.bf16.mxu0 %v124
    %136 = vmatpush1.bf16.msra.mxu0 %v123
    %137 = vmatprep.subr.bf16.mxu0 0
    %138 = vmatpush1.bf16.msra.mxu0 0
    %139 = vmatprep.subr.bf16.mxu0 0
    %140 = vmatpush1.bf16.msra.mxu0 0
    %141 = vmatprep.subr.bf16.mxu0 0
    %142 = vmatpush1.bf16.msra.mxu0 0
    %143 = vmatprep.subr.bf16.mxu0 0
    %144 = vmatpush1.bf16.msra.mxu0 0
    %145 = vmatprep.subr.bf16.mxu0 0
    %146 = vmatpush1.bf16.msra.mxu0 0
    %147 = vmatprep.subr.bf16.mxu0 0
    %148 = vmatpush1.bf16.msra.mxu0 0
    %149 = vmatprep.subr.bf16.mxu0 0
    %150 = vmatpush1.bf16.msra.mxu0 0
    %151 = vmatprep.subr.bf16.mxu0 0
    %152 = vmatpush1.bf16.msra.mxu0 0
    %153 = vmatprep.subr.bf16.mxu0 0
    %154 = vmatpush1.bf16.msra.mxu0 0
    %155 = vmatprep.subr.bf16.mxu0 0
    %156 = vmatpush1.bf16.msra.mxu0 0
    %157 = vmatprep.subr.bf16.mxu0 0
    %158 = vmatpush1.bf16.msra.mxu0 0
    %159 = vmatprep.subr.bf16.mxu0 0
    %160 = vmatpush1.bf16.msra.mxu0 0
    %161 = vmatprep.subr.bf16.mxu0 0
    %162 = vmatpush1.bf16.msra.mxu0 0
    %163 = vmatprep.subr.bf16.mxu0 0
    %164 = vmatpush1.bf16.msra.mxu0 0
    %165 = vmatprep.subr.bf16.mxu0 0
    %166 = vmatpush1.bf16.msra.mxu0 0
    %167 = vmatprep.mubr.bf16.mxu0 0
    %168 = vmatmul.mubr.bf16.gmra.mrb[0].mxu0 %v133
    %v169 = vpop.f32.mrb[0].mxu0
    %v170 = vadd.f32 %v94, %v169
    %v171 = vpop.f32.mrb[0].mxu0
    %v172 = vadd.f32 %v98, %v171
    %v173 = vpop.f32.mrb[0].mxu0
    %v174 = vpop.f32.mrb[0].mxu0
    %175 = vdwg.mxu0
    %176 = vmatprep.subr.bf16.mxu0 %v126
    %177 = vmatpush1.bf16.msra.mxu0 %v125
    %178 = vmatprep.subr.bf16.mxu0 0
    %179 = vmatpush1.bf16.msra.mxu0 0
    %180 = vmatprep.subr.bf16.mxu0 0
    %181 = vmatpush1.bf16.msra.mxu0 0
    %182 = vmatprep.subr.bf16.mxu0 0
    %183 = vmatpush1.bf16.msra.mxu0 0
    %184 = vmatprep.subr.bf16.mxu0 0
    %185 = vmatpush1.bf16.msra.mxu0 0
    %186 = vmatprep.subr.bf16.mxu0 0
    %187 = vmatpush1.bf16.msra.mxu0 0
    %188 = vmatprep.subr.bf16.mxu0 0
    %189 = vmatpush1.bf16.msra.mxu0 0
    %190 = vmatprep.subr.bf16.mxu0 0
    %191 = vmatpush1.bf16.msra.mxu0 0
    %192 = vmatprep.subr.bf16.mxu0 0
    %193 = vmatpush1.bf16.msra.mxu0 0
    %194 = vmatprep.subr.bf16.mxu0 0
    %195 = vmatpush1.bf16.msra.mxu0 0
    %196 = vmatprep.subr.bf16.mxu0 0
    %197 = vmatpush1.bf16.msra.mxu0 0
    %198 = vmatprep.subr.bf16.mxu0 0
    %199 = vmatpush1.bf16.msra.mxu0 0
    %200 = vmatprep.subr.bf16.mxu0 0
    %201 = vmatpush1.bf16.msra.mxu0 0
    %202 = vmatprep.subr.bf16.mxu0 0
    %203 = vmatpush1.bf16.msra.mxu0 0
    %204 = vmatprep.subr.bf16.mxu0 0
    %205 = vmatpush1.bf16.msra.mxu0 0
    %206 = vmatprep.subr.bf16.mxu0 0
    %207 = vmatpush1.bf16.msra.mxu0 0
    %208 = vmatprep.mubr.bf16.mxu0 0
    %209 = vmatmul.mubr.bf16.gmra.mrb[0].mxu0 %v133
    %v210 = vpop.f32.mrb[0].mxu0
    %v211 = vadd.f32 %v102, %v210
    %v212 = vpop.f32.mrb[0].mxu0
    %v213 = vadd.f32 %v106, %v212
    %v214 = vpop.f32.mrb[0].mxu0
    %v215 = vpop.f32.mrb[0].mxu0
    %216 = vdwg.mxu0
    %v217 = vmax.f32 %v170, 0.0
    %v218 = vmax.f32 %v172, 0.0
    %v219 = vmax.f32 %v211, 0.0
    %v220 = vmax.f32 %v213, 0.0
    %v221 = vpack.c.bf16 %v217, %v217
    %v222 = vpack.c.bf16 %v218, %v218
    %v223 = vpack.c.bf16 %v219, %v219
    %v224 = vpack.c.bf16 %v220, %v220
    %v225 = vld [vmem:[#allocation5] sm:$0xff]
    %v226 = vld [vmem:[#allocation5 + $0x8] sm:$0xf]
    %v227 = vld [vmem:[#allocation5 + $0xc] sm:$0xff]
    %v228 = vld [vmem:[#allocation5 + $0x14] sm:$0xf]
    %v229 = vld [vmem:[#allocation5 + $0x18] sm:$0xff]
    %v230 = vld [vmem:[#allocation5 + $0x20] sm:$0xf]
    %v231 = vld [vmem:[#allocation5 + $0x24] sm:$0xff]
    %v232 = vld [vmem:[#allocation5 + $0x2c] sm:$0xf]
    %v233 = vld [vmem:[#allocation5 + $0x30] sm:$0xff]
    %v234 = vld [vmem:[#allocation5 + $0x38] sm:$0xf]
    %v235 = vld [vmem:[#allocation5 + $0x3c] sm:$0xff]
    %v236 = vld [vmem:[#allocation5 + $0x44] sm:$0xf]
    %v237 = vld [vmem:[#allocation5 + $0x48] sm:$0xff]
    %v238 = vld [vmem:[#allocation5 + $0x50] sm:$0xf]
    %v239 = vld [vmem:[#allocation5 + $0x54] sm:$0xff]
    %v240 = vld [vmem:[#allocation5 + $0x5c] sm:$0xf]
    %v241 = vld [vmem:[#allocation5 + $0x60] sm:$0xff]
    %v242 = vld [vmem:[#allocation5 + $0x68] sm:$0xf]
    %v243 = vld [vmem:[#allocation5 + $0x6c] sm:$0xff]
    %v244 = vld [vmem:[#allocation5 + $0x74] sm:$0xf]
    %v245 = vld [vmem:[#allocation5 + $0x78] sm:$0xff]
    %v246 = vld [vmem:[#allocation5 + $0x80] sm:$0xf]
    %v247 = vld [vmem:[#allocation5 + $0x84] sm:$0xff]
    %v248 = vld [vmem:[#allocation5 + $0x8c] sm:$0xf]
    %v249 = vld [vmem:[#allocation5 + $0x90] sm:$0xff]
    %v250 = vld [vmem:[#allocation5 + $0x98] sm:$0xf]
    %v251 = vld [vmem:[#allocation5 + $0x9c] sm:$0xff]
    %v252 = vld [vmem:[#allocation5 + $0xa4] sm:$0xf]
    %v253 = vld [vmem:[#allocation5 + $0xa8] sm:$0xff]
    %v254 = vld [vmem:[#allocation5 + $0xb0] sm:$0xf]
    %v255 = vld [vmem:[#allocation5 + $0xb4] sm:$0xff]
    %v256 = vld [vmem:[#allocation5 + $0xbc] sm:$0xf]
    %v257 = vld [vmem:[#allocation5 + $0xc0] sm:$0xff]
    %v258 = vld [vmem:[#allocation5 + $0xc8] sm:$0xf]
    %v259 = vld [vmem:[#allocation5 + $0xcc] sm:$0xff]
    %v260 = vld [vmem:[#allocation5 + $0xd4] sm:$0xf]
    %v261 = vld [vmem:[#allocation5 + $0xd8] sm:$0xff]
    %v262 = vld [vmem:[#allocation5 + $0xe0] sm:$0xf]
    %v263 = vld [vmem:[#allocation5 + $0xe4] sm:$0xff]
    %v264 = vld [vmem:[#allocation5 + $0xec] sm:$0xf]
    %v265 = vld [vmem:[#allocation5 + $0xf0] sm:$0xff]
    %v266 = vld [vmem:[#allocation5 + $0xf8] sm:$0xf]
    %v267 = vld [vmem:[#allocation5 + $0xfc] sm:$0xff]
    %v268 = vld [vmem:[#allocation5 + $0x104] sm:$0xf]
    %v269 = vld [vmem:[#allocation5 + $0x108] sm:$0xff]
    %v270 = vld [vmem:[#allocation5 + $0x110] sm:$0xf]
    %v271 = vld [vmem:[#allocation5 + $0x114] sm:$0xff]
    %v272 = vld [vmem:[#allocation5 + $0x11c] sm:$0xf]
    %v273 = vld [vmem:[#allocation5 + $0x120] sm:$0xff]
    %v274 = vld [vmem:[#allocation5 + $0x128] sm:$0xf]
    %v275 = vld [vmem:[#allocation5 + $0x12c] sm:$0xff]
    %v276 = vld [vmem:[#allocation5 + $0x134] sm:$0xf]
    %v277 = vld [vmem:[#allocation5 + $0x138] sm:$0xff]
    %v278 = vld [vmem:[#allocation5 + $0x140] sm:$0xf]
    %v279 = vld [vmem:[#allocation5 + $0x144] sm:$0xff]
    %v280 = vld [vmem:[#allocation5 + $0x14c] sm:$0xf]
    %v281 = vld [vmem:[#allocation5 + $0x150] sm:$0xff]
    %v282 = vld [vmem:[#allocation5 + $0x158] sm:$0xf]
    %v283 = vld [vmem:[#allocation5 + $0x15c] sm:$0xff]
    %v284 = vld [vmem:[#allocation5 + $0x164] sm:$0xf]
    %v285 = vld [vmem:[#allocation5 + $0x168] sm:$0xff]
    %v286 = vld [vmem:[#allocation5 + $0x170] sm:$0xf]
    %v287 = vld [vmem:[#allocation5 + $0x174] sm:$0xff]
    %v288 = vld [vmem:[#allocation5 + $0x17c] sm:$0xf]
    %v289 = vld [vmem:[#allocation5 + $0x180] sm:$0xff]
    %v290 = vld [vmem:[#allocation5 + $0x188] sm:$0xf]
    %v291 = vld [vmem:[#allocation5 + $0x18c] sm:$0xff]
    %v292 = vld [vmem:[#allocation5 + $0x194] sm:$0xf]
    %v293 = vld [vmem:[#allocation5 + $0x198] sm:$0xff]
    %v294 = vld [vmem:[#allocation5 + $0x1a0] sm:$0xf]
    %v295 = vld [vmem:[#allocation5 + $0x1a4] sm:$0xff]
    %v296 = vld [vmem:[#allocation5 + $0x1ac] sm:$0xf]
    %v297 = vld [vmem:[#allocation5 + $0x1b0] sm:$0xff]
    %v298 = vld [vmem:[#allocation5 + $0x1b8] sm:$0xf]
    %v299 = vld [vmem:[#allocation5 + $0x1bc] sm:$0xff]
    %v300 = vld [vmem:[#allocation5 + $0x1c4] sm:$0xf]
    %v301 = vld [vmem:[#allocation5 + $0x1c8] sm:$0xff]
    %v302 = vld [vmem:[#allocation5 + $0x1d0] sm:$0xf]
    %v303 = vld [vmem:[#allocation5 + $0x1d4] sm:$0xff]
    %v304 = vld [vmem:[#allocation5 + $0x1dc] sm:$0xf]
    %v305 = vld [vmem:[#allocation5 + $0x1e0] sm:$0xff]
    %v306 = vld [vmem:[#allocation5 + $0x1e8] sm:$0xf]
    %v307 = vld [vmem:[#allocation5 + $0x1ec] sm:$0xff]
    %v308 = vld [vmem:[#allocation5 + $0x1f4] sm:$0xf]
    %v309 = vld [vmem:[#allocation5 + $0x1f8] sm:$0xff]
    %v310 = vld [vmem:[#allocation5 + $0x200] sm:$0xf]
    %v311 = vld [vmem:[#allocation5 + $0x204] sm:$0xff]
    %v312 = vld [vmem:[#allocation5 + $0x20c] sm:$0xf]
    %v313 = vld [vmem:[#allocation5 + $0x210] sm:$0xff]
    %v314 = vld [vmem:[#allocation5 + $0x218] sm:$0xf]
    %v315 = vld [vmem:[#allocation5 + $0x21c] sm:$0xff]
    %v316 = vld [vmem:[#allocation5 + $0x224] sm:$0xf]
    %v317 = vld [vmem:[#allocation5 + $0x228] sm:$0xff]
    %v318 = vld [vmem:[#allocation5 + $0x230] sm:$0xf]
    %v319 = vld [vmem:[#allocation5 + $0x234] sm:$0xff]
    %v320 = vld [vmem:[#allocation5 + $0x23c] sm:$0xf]
    %v321 = vld [vmem:[#allocation5 + $0x240] sm:$0xff]
    %v322 = vld [vmem:[#allocation5 + $0x248] sm:$0xf]
    %v323 = vld [vmem:[#allocation5 + $0x24c] sm:$0xff]
    %v324 = vld [vmem:[#allocation5 + $0x254] sm:$0xf]
    %v325 = vld [vmem:[#allocation5 + $0x258] sm:$0xff]
    %v326 = vld [vmem:[#allocation5 + $0x260] sm:$0xf]
    %v327 = vld [vmem:[#allocation5 + $0x264] sm:$0xff]
    %v328 = vld [vmem:[#allocation5 + $0x26c] sm:$0xf]
    %v329 = vld [vmem:[#allocation5 + $0x270] sm:$0xff]
    %v330 = vld [vmem:[#allocation5 + $0x278] sm:$0xf]
    %v331 = vld [vmem:[#allocation5 + $0x27c] sm:$0xff]
    %v332 = vld [vmem:[#allocation5 + $0x284] sm:$0xf]
    %v333 = vld [vmem:[#allocation5 + $0x288] sm:$0xff]
    %v334 = vld [vmem:[#allocation5 + $0x290] sm:$0xf]
    %v335 = vld [vmem:[#allocation5 + $0x294] sm:$0xff]
    %v336 = vld [vmem:[#allocation5 + $0x29c] sm:$0xf]
    %v337 = vld [vmem:[#allocation5 + $0x2a0] sm:$0xff]
    %v338 = vld [vmem:[#allocation5 + $0x2a8] sm:$0xf]
    %v339 = vld [vmem:[#allocation5 + $0x2ac] sm:$0xff]
    %v340 = vld [vmem:[#allocation5 + $0x2b4] sm:$0xf]
    %v341 = vld [vmem:[#allocation5 + $0x2b8] sm:$0xff]
    %v342 = vld [vmem:[#allocation5 + $0x2c0] sm:$0xf]
    %v343 = vld [vmem:[#allocation5 + $0x2c4] sm:$0xff]
    %v344 = vld [vmem:[#allocation5 + $0x2cc] sm:$0xf]
    %v345 = vld [vmem:[#allocation5 + $0x2d0] sm:$0xff]
    %v346 = vld [vmem:[#allocation5 + $0x2d8] sm:$0xf]
    %v347 = vld [vmem:[#allocation5 + $0x2dc] sm:$0xff]
    %v348 = vld [vmem:[#allocation5 + $0x2e4] sm:$0xf]
    %v349 = vld [vmem:[#allocation5 + $0x2e8] sm:$0xff]
    %v350 = vld [vmem:[#allocation5 + $0x2f0] sm:$0xf]
    %v351 = vld [vmem:[#allocation5 + $0x2f4] sm:$0xff]
    %v352 = vld [vmem:[#allocation5 + $0x2fc] sm:$0xf]
    %v353 = vld [vmem:[#allocation7] sm:$0x7]
    %v355 = vlaneseq
    %v356 = vshrl.u32 %v355, 7
    %v357 = vsub.s32 0, %v356
    %v358 = vrot.slane %v353, %v357
    %v359 = vlaneseq
    %v360 = vshrl.u32 %v359, 7
    %v361 = vsub.s32 1, %v360
    %v362 = vrot.slane %v353, %v361
    %v363 = vlaneseq
    %v364 = vshrl.u32 %v363, 7
    %v365 = vsub.s32 2, %v364
    %v366 = vrot.slane %v353, %v365
    %v498 = vunpack.c.l.b16 %v225
    %v499 = vunpack.c.h.b16 %v225
    %v500 = vunpack.c.l.b16 %v226
    %v501 = vunpack.c.l.b16 %v227
    %v502 = vunpack.c.h.b16 %v227
    %v503 = vunpack.c.l.b16 %v228
    %v504 = vunpack.c.l.b16 %v229
    %v505 = vunpack.c.h.b16 %v229
    %v506 = vunpack.c.l.b16 %v230
    %v507 = vunpack.c.l.b16 %v231
    %v508 = vunpack.c.h.b16 %v231
    %v509 = vunpack.c.l.b16 %v232
    %v510 = vunpack.c.l.b16 %v233
    %v511 = vunpack.c.h.b16 %v233
    %v512 = vunpack.c.l.b16 %v234
    %v513 = vunpack.c.l.b16 %v235
    %v514 = vunpack.c.h.b16 %v235
    %v515 = vunpack.c.l.b16 %v236
    %v516 = vunpack.c.l.b16 %v237
    %v517 = vunpack.c.h.b16 %v237
    %v518 = vunpack.c.l.b16 %v238
    %v519 = vunpack.c.l.b16 %v239
    %v520 = vunpack.c.h.b16 %v239
    %v521 = vunpack.c.l.b16 %v240
    %v522 = vunpack.c.l.b16 %v241
    %v523 = vunpack.c.h.b16 %v241
    %v524 = vunpack.c.l.b16 %v242
    %v525 = vunpack.c.l.b16 %v243
    %v526 = vunpack.c.h.b16 %v243
    %v527 = vunpack.c.l.b16 %v244
    %v528 = vunpack.c.l.b16 %v245
    %v529 = vunpack.c.h.b16 %v245
    %v530 = vunpack.c.l.b16 %v246
    %v531 = vunpack.c.l.b16 %v247
    %v532 = vunpack.c.h.b16 %v247
    %v533 = vunpack.c.l.b16 %v248
    %v534 = vunpack.c.l.b16 %v249
    %v535 = vunpack.c.h.b16 %v249
    %v536 = vunpack.c.l.b16 %v250
    %v537 = vunpack.c.l.b16 %v251
    %v538 = vunpack.c.h.b16 %v251
    %v539 = vunpack.c.l.b16 %v252
    %v540 = vunpack.c.l.b16 %v253
    %v541 = vunpack.c.h.b16 %v253
    %v542 = vunpack.c.l.b16 %v254
    %v543 = vunpack.c.l.b16 %v255
    %v544 = vunpack.c.h.b16 %v255
    %v545 = vunpack.c.l.b16 %v256
    %v546 = vunpack.c.l.b16 %v257
    %v547 = vunpack.c.h.b16 %v257
    %v548 = vunpack.c.l.b16 %v258
    %v549 = vunpack.c.l.b16 %v259
    %v550 = vunpack.c.h.b16 %v259
    %v551 = vunpack.c.l.b16 %v260
    %v552 = vunpack.c.l.b16 %v261
    %v553 = vunpack.c.h.b16 %v261
    %v554 = vunpack.c.l.b16 %v262
    %v555 = vunpack.c.l.b16 %v263
    %v556 = vunpack.c.h.b16 %v263
    %v557 = vunpack.c.l.b16 %v264
    %v558 = vunpack.c.l.b16 %v265
    %v559 = vunpack.c.h.b16 %v265
    %v560 = vunpack.c.l.b16 %v266
    %v561 = vunpack.c.l.b16 %v267
    %v562 = vunpack.c.h.b16 %v267
    %v563 = vunpack.c.l.b16 %v268
    %v564 = vunpack.c.l.b16 %v269
    %v565 = vunpack.c.h.b16 %v269
    %v566 = vunpack.c.l.b16 %v270
    %v567 = vunpack.c.l.b16 %v271
    %v568 = vunpack.c.h.b16 %v271
    %v569 = vunpack.c.l.b16 %v272
    %v570 = vunpack.c.l.b16 %v273
    %v571 = vunpack.c.h.b16 %v273
    %v572 = vunpack.c.l.b16 %v274
    %v573 = vunpack.c.l.b16 %v275
    %v574 = vunpack.c.h.b16 %v275
    %v575 = vunpack.c.l.b16 %v276
    %v576 = vunpack.c.l.b16 %v277
    %v577 = vunpack.c.h.b16 %v277
    %v578 = vunpack.c.l.b16 %v278
    %v579 = vunpack.c.l.b16 %v279
    %v580 = vunpack.c.h.b16 %v279
    %v581 = vunpack.c.l.b16 %v280
    %v582 = vunpack.c.l.b16 %v281
    %v583 = vunpack.c.h.b16 %v281
    %v584 = vunpack.c.l.b16 %v282
    %v585 = vunpack.c.l.b16 %v283
    %v586 = vunpack.c.h.b16 %v283
    %v587 = vunpack.c.l.b16 %v284
    %v588 = vunpack.c.l.b16 %v285
    %v589 = vunpack.c.h.b16 %v285
    %v590 = vunpack.c.l.b16 %v286
    %v591 = vunpack.c.l.b16 %v287
    %v592 = vunpack.c.h.b16 %v287
    %v593 = vunpack.c.l.b16 %v288
    %v594 = vunpack.c.l.b16 %v289
    %v595 = vunpack.c.h.b16 %v289
    %v596 = vunpack.c.l.b16 %v290
    %v597 = vunpack.c.l.b16 %v291
    %v598 = vunpack.c.h.b16 %v291
    %v599 = vunpack.c.l.b16 %v292
    %v600 = vunpack.c.l.b16 %v293
    %v601 = vunpack.c.h.b16 %v293
    %v602 = vunpack.c.l.b16 %v294
    %v603 = vunpack.c.l.b16 %v295
    %v604 = vunpack.c.h.b16 %v295
    %v605 = vunpack.c.l.b16 %v296
    %v606 = vunpack.c.l.b16 %v297
    %v607 = vunpack.c.h.b16 %v297
    %v608 = vunpack.c.l.b16 %v298
    %v609 = vunpack.c.l.b16 %v299
    %v610 = vunpack.c.h.b16 %v299
    %v611 = vunpack.c.l.b16 %v300
    %v612 = vunpack.c.l.b16 %v301
    %v613 = vunpack.c.h.b16 %v301
    %v614 = vunpack.c.l.b16 %v302
    %v615 = vunpack.c.l.b16 %v303
    %v616 = vunpack.c.h.b16 %v303
    %v617 = vunpack.c.l.b16 %v304
    %v618 = vunpack.c.l.b16 %v305
    %v619 = vunpack.c.h.b16 %v305
    %v620 = vunpack.c.l.b16 %v306
    %v621 = vunpack.c.l.b16 %v307
    %v622 = vunpack.c.h.b16 %v307
    %v623 = vunpack.c.l.b16 %v308
    %v624 = vunpack.c.l.b16 %v309
    %v625 = vunpack.c.h.b16 %v309
    %v626 = vunpack.c.l.b16 %v310
    %v627 = vunpack.c.l.b16 %v311
    %v628 = vunpack.c.h.b16 %v311
    %v629 = vunpack.c.l.b16 %v312
    %v630 = vunpack.c.l.b16 %v313
    %v631 = vunpack.c.h.b16 %v313
    %v632 = vunpack.c.l.b16 %v314
    %v633 = vunpack.c.l.b16 %v315
    %v634 = vunpack.c.h.b16 %v315
    %v635 = vunpack.c.l.b16 %v316
    %v636 = vunpack.c.l.b16 %v317
    %v637 = vunpack.c.h.b16 %v317
    %v638 = vunpack.c.l.b16 %v318
    %v639 = vunpack.c.l.b16 %v319
    %v640 = vunpack.c.h.b16 %v319
    %v641 = vunpack.c.l.b16 %v320
    %v642 = vunpack.c.l.b16 %v321
    %v643 = vunpack.c.h.b16 %v321
    %v644 = vunpack.c.l.b16 %v322
    %v645 = vunpack.c.l.b16 %v323
    %v646 = vunpack.c.h.b16 %v323
    %v647 = vunpack.c.l.b16 %v324
    %v648 = vunpack.c.l.b16 %v325
    %v649 = vunpack.c.h.b16 %v325
    %v650 = vunpack.c.l.b16 %v326
    %v651 = vunpack.c.l.b16 %v327
    %v652 = vunpack.c.h.b16 %v327
    %v653 = vunpack.c.l.b16 %v328
    %v654 = vunpack.c.l.b16 %v329
    %v655 = vunpack.c.h.b16 %v329
    %v656 = vunpack.c.l.b16 %v330
    %v657 = vunpack.c.l.b16 %v331
    %v658 = vunpack.c.h.b16 %v331
    %v659 = vunpack.c.l.b16 %v332
    %v660 = vunpack.c.l.b16 %v333
    %v661 = vunpack.c.h.b16 %v333
    %v662 = vunpack.c.l.b16 %v334
    %v663 = vunpack.c.l.b16 %v335
    %v664 = vunpack.c.h.b16 %v335
    %v665 = vunpack.c.l.b16 %v336
    %v666 = vunpack.c.l.b16 %v337
    %v667 = vunpack.c.h.b16 %v337
    %v668 = vunpack.c.l.b16 %v338
    %v669 = vunpack.c.l.b16 %v339
    %v670 = vunpack.c.h.b16 %v339
    %v671 = vunpack.c.l.b16 %v340
    %v672 = vunpack.c.l.b16 %v341
    %v673 = vunpack.c.h.b16 %v341
    %v674 = vunpack.c.l.b16 %v342
    %v675 = vunpack.c.l.b16 %v343
    %v676 = vunpack.c.h.b16 %v343
    %v677 = vunpack.c.l.b16 %v344
    %v678 = vunpack.c.l.b16 %v345
    %v679 = vunpack.c.h.b16 %v345
    %v680 = vunpack.c.l.b16 %v346
    %v681 = vunpack.c.l.b16 %v347
    %v682 = vunpack.c.h.b16 %v347
    %v683 = vunpack.c.l.b16 %v348
    %v684 = vunpack.c.l.b16 %v349
    %v685 = vunpack.c.h.b16 %v349
    %v686 = vunpack.c.l.b16 %v350
    %v687 = vunpack.c.l.b16 %v351
    %v688 = vunpack.c.h.b16 %v351
    %v689 = vunpack.c.l.b16 %v352
    %v690 = vpack.c.b16 %v501, %v498
    %v691 = vpack.c.b16 %v502, %v499
    %v692 = vpack.c.b16 %v503, %v500
    %v693 = vpack.c.b16 %v507, %v504
    %v694 = vpack.c.b16 %v508, %v505
    %v695 = vpack.c.b16 %v509, %v506
    %v696 = vpack.c.b16 %v513, %v510
    %v697 = vpack.c.b16 %v514, %v511
    %v698 = vpack.c.b16 %v515, %v512
    %v699 = vpack.c.b16 %v519, %v516
    %v700 = vpack.c.b16 %v520, %v517
    %v701 = vpack.c.b16 %v521, %v518
    %v702 = vpack.c.b16 %v525, %v522
    %v703 = vpack.c.b16 %v526, %v523
    %v704 = vpack.c.b16 %v527, %v524
    %v705 = vpack.c.b16 %v531, %v528
    %v706 = vpack.c.b16 %v532, %v529
    %v707 = vpack.c.b16 %v533, %v530
    %v708 = vpack.c.b16 %v537, %v534
    %v709 = vpack.c.b16 %v538, %v535
    %v710 = vpack.c.b16 %v539, %v536
    %v711 = vpack.c.b16 %v543, %v540
    %v712 = vpack.c.b16 %v544, %v541
    %v713 = vpack.c.b16 %v545, %v542
    %v714 = vpack.c.b16 %v549, %v546
    %v715 = vpack.c.b16 %v550, %v547
    %v716 = vpack.c.b16 %v551, %v548
    %v717 = vpack.c.b16 %v555, %v552
    %v718 = vpack.c.b16 %v556, %v553
    %v719 = vpack.c.b16 %v557, %v554
    %v720 = vpack.c.b16 %v561, %v558
    %v721 = vpack.c.b16 %v562, %v559
    %v722 = vpack.c.b16 %v563, %v560
    %v723 = vpack.c.b16 %v567, %v564
    %v724 = vpack.c.b16 %v568, %v565
    %v725 = vpack.c.b16 %v569, %v566
    %v726 = vpack.c.b16 %v573, %v570
    %v727 = vpack.c.b16 %v574, %v571
    %v728 = vpack.c.b16 %v575, %v572
    %v729 = vpack.c.b16 %v579, %v576
    %v730 = vpack.c.b16 %v580, %v577
    %v731 = vpack.c.b16 %v581, %v578
    %v732 = vpack.c.b16 %v585, %v582
    %v733 = vpack.c.b16 %v586, %v583
    %v734 = vpack.c.b16 %v587, %v584
    %v735 = vpack.c.b16 %v591, %v588
    %v736 = vpack.c.b16 %v592, %v589
    %v737 = vpack.c.b16 %v593, %v590
    %v738 = vpack.c.b16 %v597, %v594
    %v739 = vpack.c.b16 %v598, %v595
    %v740 = vpack.c.b16 %v599, %v596
    %v741 = vpack.c.b16 %v603, %v600
    %v742 = vpack.c.b16 %v604, %v601
    %v743 = vpack.c.b16 %v605, %v602
    %v744 = vpack.c.b16 %v609, %v606
    %v745 = vpack.c.b16 %v610, %v607
    %v746 = vpack.c.b16 %v611, %v608
    %v747 = vpack.c.b16 %v615, %v612
    %v748 = vpack.c.b16 %v616, %v613
    %v749 = vpack.c.b16 %v617, %v614
    %v750 = vpack.c.b16 %v621, %v618
    %v751 = vpack.c.b16 %v622, %v619
    %v752 = vpack.c.b16 %v623, %v620
    %v753 = vpack.c.b16 %v627, %v624
    %v754 = vpack.c.b16 %v628, %v625
    %v755 = vpack.c.b16 %v629, %v626
    %v756 = vpack.c.b16 %v633, %v630
    %v757 = vpack.c.b16 %v634, %v631
    %v758 = vpack.c.b16 %v635, %v632
    %v759 = vpack.c.b16 %v639, %v636
    %v760 = vpack.c.b16 %v640, %v637
    %v761 = vpack.c.b16 %v641, %v638
    %v762 = vpack.c.b16 %v645, %v642
    %v763 = vpack.c.b16 %v646, %v643
    %v764 = vpack.c.b16 %v647, %v644
    %v765 = vpack.c.b16 %v651, %v648
    %v766 = vpack.c.b16 %v652, %v649
    %v767 = vpack.c.b16 %v653, %v650
    %v768 = vpack.c.b16 %v657, %v654
    %v769 = vpack.c.b16 %v658, %v655
    %v770 = vpack.c.b16 %v659, %v656
    %v771 = vpack.c.b16 %v663, %v660
    %v772 = vpack.c.b16 %v664, %v661
    %v773 = vpack.c.b16 %v665, %v662
    %v774 = vpack.c.b16 %v669, %v666
    %v775 = vpack.c.b16 %v670, %v667
    %v776 = vpack.c.b16 %v671, %v668
    %v777 = vpack.c.b16 %v675, %v672
    %v778 = vpack.c.b16 %v676, %v673
    %v779 = vpack.c.b16 %v677, %v674
    %v780 = vpack.c.b16 %v681, %v678
    %v781 = vpack.c.b16 %v682, %v679
    %v782 = vpack.c.b16 %v683, %v680
    %v783 = vpack.c.b16 %v687, %v684
    %v784 = vpack.c.b16 %v688, %v685
    %v785 = vpack.c.b16 %v689, %v686
    %882 = vmatprep.subr.bf16.mxu0 %v691
    %883 = vmatpush1.bf16.msra.mxu0 %v690
    %884 = vmatprep.subr.bf16.mxu0 %v694
    %885 = vmatpush1.bf16.msra.mxu0 %v693
    %886 = vmatprep.subr.bf16.mxu0 %v697
    %887 = vmatpush1.bf16.msra.mxu0 %v696
    %888 = vmatprep.subr.bf16.mxu0 %v700
    %889 = vmatpush1.bf16.msra.mxu0 %v699
    %890 = vmatprep.subr.bf16.mxu0 %v703
    %891 = vmatpush1.bf16.msra.mxu0 %v702
    %892 = vmatprep.subr.bf16.mxu0 %v706
    %893 = vmatpush1.bf16.msra.mxu0 %v705
    %894 = vmatprep.subr.bf16.mxu0 %v709
    %895 = vmatpush1.bf16.msra.mxu0 %v708
    %896 = vmatprep.subr.bf16.mxu0 %v712
    %897 = vmatpush1.bf16.msra.mxu0 %v711
    %898 = vmatprep.subr.bf16.mxu0 %v715
    %899 = vmatpush1.bf16.msra.mxu0 %v714
    %900 = vmatprep.subr.bf16.mxu0 %v718
    %901 = vmatpush1.bf16.msra.mxu0 %v717
    %902 = vmatprep.subr.bf16.mxu0 %v721
    %903 = vmatpush1.bf16.msra.mxu0 %v720
    %904 = vmatprep.subr.bf16.mxu0 %v724
    %905 = vmatpush1.bf16.msra.mxu0 %v723
    %906 = vmatprep.subr.bf16.mxu0 %v727
    %907 = vmatpush1.bf16.msra.mxu0 %v726
    %908 = vmatprep.subr.bf16.mxu0 %v730
    %909 = vmatpush1.bf16.msra.mxu0 %v729
    %910 = vmatprep.subr.bf16.mxu0 %v733
    %911 = vmatpush1.bf16.msra.mxu0 %v732
    %912 = vmatprep.subr.bf16.mxu0 %v736
    %913 = vmatpush1.bf16.msra.mxu0 %v735
    %914 = vmatprep.mubr.bf16.mxu0 %v222
    %915 = vmatmul.mubr.bf16.gmra.mrb[0].mxu0 %v221
    %v916 = vpop.f32.mrb[0].mxu0
    %v917 = vadd.f32 %v358, %v916
    %v918 = vpop.f32.mrb[0].mxu0
    %v919 = vadd.f32 %v362, %v918
    %v920 = vpop.f32.mrb[0].mxu0
    %v921 = vpop.f32.mrb[0].mxu0
    %922 = vdwg.mxu0
    %923 = vmatprep.subr.bf16.mxu0 %v739
    %924 = vmatpush1.bf16.msra.mxu0 %v738
    %925 = vmatprep.subr.bf16.mxu0 %v742
    %926 = vmatpush1.bf16.msra.mxu0 %v741
    %927 = vmatprep.subr.bf16.mxu0 %v745
    %928 = vmatpush1.bf16.msra.mxu0 %v744
    %929 = vmatprep.subr.bf16.mxu0 %v748
    %930 = vmatpush1.bf16.msra.mxu0 %v747
    %931 = vmatprep.subr.bf16.mxu0 %v751
    %932 = vmatpush1.bf16.msra.mxu0 %v750
    %933 = vmatprep.subr.bf16.mxu0 %v754
    %934 = vmatpush1.bf16.msra.mxu0 %v753
    %935 = vmatprep.subr.bf16.mxu0 %v757
    %936 = vmatpush1.bf16.msra.mxu0 %v756
    %937 = vmatprep.subr.bf16.mxu0 %v760
    %938 = vmatpush1.bf16.msra.mxu0 %v759
    %939 = vmatprep.subr.bf16.mxu0 %v763
    %940 = vmatpush1.bf16.msra.mxu0 %v762
    %941 = vmatprep.subr.bf16.mxu0 %v766
    %942 = vmatpush1.bf16.msra.mxu0 %v765
    %943 = vmatprep.subr.bf16.mxu0 %v769
    %944 = vmatpush1.bf16.msra.mxu0 %v768
    %945 = vmatprep.subr.bf16.mxu0 %v772
    %946 = vmatpush1.bf16.msra.mxu0 %v771
    %947 = vmatprep.subr.bf16.mxu0 %v775
    %948 = vmatpush1.bf16.msra.mxu0 %v774
    %949 = vmatprep.subr.bf16.mxu0 %v778
    %950 = vmatpush1.bf16.msra.mxu0 %v777
    %951 = vmatprep.subr.bf16.mxu0 %v781
    %952 = vmatpush1.bf16.msra.mxu0 %v780
    %953 = vmatprep.subr.bf16.mxu0 %v784
    %954 = vmatpush1.bf16.msra.mxu0 %v783
    %955 = vmatprep.mubr.bf16.mxu0 %v224
    %956 = vmatmul.mubr.bf16.gmra.mrb[0].mxu0 %v223
    %v957 = vpop.f32.mrb[0].mxu0
    %v958 = vadd.f32 %v917, %v957
    %v959 = vpop.f32.mrb[0].mxu0
    %v960 = vadd.f32 %v919, %v959
    %v961 = vpop.f32.mrb[0].mxu0
    %v962 = vpop.f32.mrb[0].mxu0
    %963 = vdwg.mxu0
    %964 = vmatprep.subr.bf16.mxu0 0
    %965 = vmatpush1.bf16.msra.mxu0 %v692
    %966 = vmatprep.subr.bf16.mxu0 0
    %967 = vmatpush1.bf16.msra.mxu0 %v695
    %968 = vmatprep.subr.bf16.mxu0 0
    %969 = vmatpush1.bf16.msra.mxu0 %v698
    %970 = vmatprep.subr.bf16.mxu0 0
    %971 = vmatpush1.bf16.msra.mxu0 %v701
    %972 = vmatprep.subr.bf16.mxu0 0
    %973 = vmatpush1.bf16.msra.mxu0 %v704
    %974 = vmatprep.subr.bf16.mxu0 0
    %975 = vmatpush1.bf16.msra.mxu0 %v707
    %976 = vmatprep.subr.bf16.mxu0 0
    %977 = vmatpush1.bf16.msra.mxu0 %v710
    %978 = vmatprep.subr.bf16.mxu0 0
    %979 = vmatpush1.bf16.msra.mxu0 %v713
    %980 = vmatprep.subr.bf16.mxu0 0
    %981 = vmatpush1.bf16.msra.mxu0 %v716
    %982 = vmatprep.subr.bf16.mxu0 0
    %983 = vmatpush1.bf16.msra.mxu0 %v719
    %984 = vmatprep.subr.bf16.mxu0 0
    %985 = vmatpush1.bf16.msra.mxu0 %v722
    %986 = vmatprep.subr.bf16.mxu0 0
    %987 = vmatpush1.bf16.msra.mxu0 %v725
    %988 = vmatprep.subr.bf16.mxu0 0
    %989 = vmatpush1.bf16.msra.mxu0 %v728
    %990 = vmatprep.subr.bf16.mxu0 0
    %991 = vmatpush1.bf16.msra.mxu0 %v731
    %992 = vmatprep.subr.bf16.mxu0 0
    %993 = vmatpush1.bf16.msra.mxu0 %v734
    %994 = vmatprep.subr.bf16.mxu0 0
    %995 = vmatpush1.bf16.msra.mxu0 %v737
    %996 = vmatprep.mubr.bf16.mxu0 %v222
    %997 = vmatmul.mubr.bf16.gmra.mrb[0].mxu0 %v221
    %v998 = vpop.f32.mrb[0].mxu0
    %v999 = vadd.f32 %v366, %v998
    %v1000 = vpop.f32.mrb[0].mxu0
    %v1001 = vpop.f32.mrb[0].mxu0
    %v1002 = vpop.f32.mrb[0].mxu0
    %1003 = vdwg.mxu0
    %1004 = vmatprep.subr.bf16.mxu0 0
    %1005 = vmatpush1.bf16.msra.mxu0 %v740
    %1006 = vmatprep.subr.bf16.mxu0 0
    %1007 = vmatpush1.bf16.msra.mxu0 %v743
    %1008 = vmatprep.subr.bf16.mxu0 0
    %1009 = vmatpush1.bf16.msra.mxu0 %v746
    %1010 = vmatprep.subr.bf16.mxu0 0
    %1011 = vmatpush1.bf16.msra.mxu0 %v749
    %1012 = vmatprep.subr.bf16.mxu0 0
    %1013 = vmatpush1.bf16.msra.mxu0 %v752
    %1014 = vmatprep.subr.bf16.mxu0 0
    %1015 = vmatpush1.bf16.msra.mxu0 %v755
    %1016 = vmatprep.subr.bf16.mxu0 0
    %1017 = vmatpush1.bf16.msra.mxu0 %v758
    %1018 = vmatprep.subr.bf16.mxu0 0
    %1019 = vmatpush1.bf16.msra.mxu0 %v761
    %1020 = vmatprep.subr.bf16.mxu0 0
    %1021 = vmatpush1.bf16.msra.mxu0 %v764
    %1022 = vmatprep.subr.bf16.mxu0 0
    %1023 = vmatpush1.bf16.msra.mxu0 %v767
    %1024 = vmatprep.subr.bf16.mxu0 0
    %1025 = vmatpush1.bf16.msra.mxu0 %v770
    %1026 = vmatprep.subr.bf16.mxu0 0
    %1027 = vmatpush1.bf16.msra.mxu0 %v773
    %1028 = vmatprep.subr.bf16.mxu0 0
    %1029 = vmatpush1.bf16.msra.mxu0 %v776
    %1030 = vmatprep.subr.bf16.mxu0 0
    %1031 = vmatpush1.bf16.msra.mxu0 %v779
    %1032 = vmatprep.subr.bf16.mxu0 0
    %1033 = vmatpush1.bf16.msra.mxu0 %v782
    %1034 = vmatprep.subr.bf16.mxu0 0
    %1035 = vmatpush1.bf16.msra.mxu0 %v785
    %1036 = vmatprep.mubr.bf16.mxu0 %v224
    %1037 = vmatmul.mubr.bf16.gmra.mrb[0].mxu0 %v223
    %v1038 = vpop.f32.mrb[0].mxu0
    %v1039 = vadd.f32 %v999, %v1038
    %v1040 = vpop.f32.mrb[0].mxu0
    %v1041 = vpop.f32.mrb[0].mxu0
    %v1042 = vpop.f32.mrb[0].mxu0
    %1043 = vdwg.mxu0
    %v1044 = vmax.f32 %v958, 0.0
    %v1045 = vmax.f32 %v960, 0.0
    %v1046 = vmax.f32 %v1039, 0.0
    %v1047 = vpack.c.bf16 %v1044, %v1044
    %v1048 = vpack.c.bf16 %v1045, %v1045
    %v1049 = vpack.c.bf16 %v1046, %v1046
    %v1050 = vld [vmem:[#allocation8] sm:$0xf]
    %v1051 = vld [vmem:[#allocation8 + $0x4] sm:$0xf]
    %v1052 = vld [vmem:[#allocation8 + $0x8] sm:$0xf]
    %v1053 = vld [vmem:[#allocation8 + $0xc] sm:$0xf]
    %v1054 = vld [vmem:[#allocation8 + $0x10] sm:$0xf]
    %v1055 = vld [vmem:[#allocation8 + $0x14] sm:$0xf]
    %v1056 = vld [vmem:[#allocation8 + $0x18] sm:$0xf]
    %v1057 = vld [vmem:[#allocation8 + $0x1c] sm:$0xf]
    %v1058 = vld [vmem:[#allocation8 + $0x20] sm:$0xf]
    %v1059 = vld [vmem:[#allocation8 + $0x24] sm:$0xf]
    %v1060 = vld [vmem:[#allocation8 + $0x28] sm:$0xf]
    %v1061 = vld [vmem:[#allocation8 + $0x2c] sm:$0xf]
    %v1062 = vld [vmem:[#allocation8 + $0x30] sm:$0xf]
    %v1063 = vld [vmem:[#allocation8 + $0x34] sm:$0xf]
    %v1064 = vld [vmem:[#allocation8 + $0x38] sm:$0xf]
    %v1065 = vld [vmem:[#allocation8 + $0x3c] sm:$0xf]
    %v1066 = vld [vmem:[#allocation8 + $0x40] sm:$0xf]
    %v1067 = vld [vmem:[#allocation8 + $0x44] sm:$0xf]
    %v1068 = vld [vmem:[#allocation8 + $0x48] sm:$0xf]
    %v1069 = vld [vmem:[#allocation8 + $0x4c] sm:$0xf]
    %v1070 = vld [vmem:[#allocation8 + $0x50] sm:$0xf]
    %v1071 = vld [vmem:[#allocation8 + $0x54] sm:$0xf]
    %v1072 = vld [vmem:[#allocation8 + $0x58] sm:$0xf]
    %v1073 = vld [vmem:[#allocation8 + $0x5c] sm:$0xf]
    %v1074 = vld [vmem:[#allocation8 + $0x60] sm:$0xf]
    %v1075 = vld [vmem:[#allocation8 + $0x64] sm:$0xf]
    %v1076 = vld [vmem:[#allocation8 + $0x68] sm:$0xf]
    %v1077 = vld [vmem:[#allocation8 + $0x6c] sm:$0xf]
    %v1078 = vld [vmem:[#allocation8 + $0x70] sm:$0xf]
    %v1079 = vld [vmem:[#allocation8 + $0x74] sm:$0xf]
    %v1080 = vld [vmem:[#allocation8 + $0x78] sm:$0xf]
    %v1081 = vld [vmem:[#allocation8 + $0x7c] sm:$0xf]
    %v1082 = vld [vmem:[#allocation8 + $0x80] sm:$0xf]
    %v1083 = vld [vmem:[#allocation8 + $0x84] sm:$0xf]
    %v1084 = vld [vmem:[#allocation8 + $0x88] sm:$0xf]
    %v1085 = vld [vmem:[#allocation8 + $0x8c] sm:$0xf]
    %v1086 = vld [vmem:[#allocation8 + $0x90] sm:$0xf]
    %v1087 = vld [vmem:[#allocation8 + $0x94] sm:$0xf]
    %v1088 = vld [vmem:[#allocation8 + $0x98] sm:$0xf]
    %v1089 = vld [vmem:[#allocation8 + $0x9c] sm:$0xf]
    %v1090 = vld [vmem:[#allocation8 + $0xa0] sm:$0xf]
    %v1091 = vld [vmem:[#allocation8 + $0xa4] sm:$0xf]
    %v1092 = vld [vmem:[#allocation8 + $0xa8] sm:$0xf]
    %v1093 = vld [vmem:[#allocation8 + $0xac] sm:$0xf]
    %v1094 = vld [vmem:[#allocation8 + $0xb0] sm:$0xf]
    %v1095 = vld [vmem:[#allocation8 + $0xb4] sm:$0xf]
    %v1096 = vld [vmem:[#allocation8 + $0xb8] sm:$0xf]
    %v1097 = vld [vmem:[#allocation8 + $0xbc] sm:$0xf]
    %v1098 = vld [vmem:[%s6] sm:$0x1]
    %v1100 = vlaneseq
    %v1101 = vshrl.u32 %v1100, 7
    %v1102 = vsub.s32 0, %v1101
    %v1103 = vrot.slane %v1098, %v1102
    %v1153 = vunpack.c.l.b16 %v1050
    %v1154 = vunpack.c.l.b16 %v1051
    %v1155 = vunpack.c.l.b16 %v1052
    %v1156 = vunpack.c.l.b16 %v1053
    %v1157 = vunpack.c.l.b16 %v1054
    %v1158 = vunpack.c.l.b16 %v1055
    %v1159 = vunpack.c.l.b16 %v1056
    %v1160 = vunpack.c.l.b16 %v1057
    %v1161 = vunpack.c.l.b16 %v1058
    %v1162 = vunpack.c.l.b16 %v1059
    %v1163 = vunpack.c.l.b16 %v1060
    %v1164 = vunpack.c.l.b16 %v1061
    %v1165 = vunpack.c.l.b16 %v1062
    %v1166 = vunpack.c.l.b16 %v1063
    %v1167 = vunpack.c.l.b16 %v1064
    %v1168 = vunpack.c.l.b16 %v1065
    %v1169 = vunpack.c.l.b16 %v1066
    %v1170 = vunpack.c.l.b16 %v1067
    %v1171 = vunpack.c.l.b16 %v1068
    %v1172 = vunpack.c.l.b16 %v1069
    %v1173 = vunpack.c.l.b16 %v1070
    %v1174 = vunpack.c.l.b16 %v1071
    %v1175 = vunpack.c.l.b16 %v1072
    %v1176 = vunpack.c.l.b16 %v1073
    %v1177 = vunpack.c.l.b16 %v1074
    %v1178 = vunpack.c.l.b16 %v1075
    %v1179 = vunpack.c.l.b16 %v1076
    %v1180 = vunpack.c.l.b16 %v1077
    %v1181 = vunpack.c.l.b16 %v1078
    %v1182 = vunpack.c.l.b16 %v1079
    %v1183 = vunpack.c.l.b16 %v1080
    %v1184 = vunpack.c.l.b16 %v1081
    %v1185 = vunpack.c.l.b16 %v1082
    %v1186 = vunpack.c.l.b16 %v1083
    %v1187 = vunpack.c.l.b16 %v1084
    %v1188 = vunpack.c.l.b16 %v1085
    %v1189 = vunpack.c.l.b16 %v1086
    %v1190 = vunpack.c.l.b16 %v1087
    %v1191 = vunpack.c.l.b16 %v1088
    %v1192 = vunpack.c.l.b16 %v1089
    %v1193 = vunpack.c.l.b16 %v1090
    %v1194 = vunpack.c.l.b16 %v1091
    %v1195 = vunpack.c.l.b16 %v1092
    %v1196 = vunpack.c.l.b16 %v1093
    %v1197 = vunpack.c.l.b16 %v1094
    %v1198 = vunpack.c.l.b16 %v1095
    %v1199 = vunpack.c.l.b16 %v1096
    %v1200 = vunpack.c.l.b16 %v1097
    %v1201 = vpack.c.b16 %v1154, %v1153
    %v1202 = vpack.c.b16 %v1156, %v1155
    %v1203 = vpack.c.b16 %v1158, %v1157
    %v1204 = vpack.c.b16 %v1160, %v1159
    %v1205 = vpack.c.b16 %v1162, %v1161
    %v1206 = vpack.c.b16 %v1164, %v1163
    %v1207 = vpack.c.b16 %v1166, %v1165
    %v1208 = vpack.c.b16 %v1168, %v1167
    %v1209 = vpack.c.b16 %v1170, %v1169
    %v1210 = vpack.c.b16 %v1172, %v1171
    %v1211 = vpack.c.b16 %v1174, %v1173
    %v1212 = vpack.c.b16 %v1176, %v1175
    %v1213 = vpack.c.b16 %v1178, %v1177
    %v1214 = vpack.c.b16 %v1180, %v1179
    %v1215 = vpack.c.b16 %v1182, %v1181
    %v1216 = vpack.c.b16 %v1184, %v1183
    %v1217 = vpack.c.b16 %v1186, %v1185
    %v1218 = vpack.c.b16 %v1188, %v1187
    %v1219 = vpack.c.b16 %v1190, %v1189
    %v1220 = vpack.c.b16 %v1192, %v1191
    %v1221 = vpack.c.b16 %v1194, %v1193
    %v1222 = vpack.c.b16 %v1196, %v1195
    %v1223 = vpack.c.b16 %v1198, %v1197
    %v1224 = vpack.c.b16 %v1200, %v1199
    %1249 = vmatprep.subr.bf16.mxu0 0
    %1250 = vmatpush1.bf16.msra.mxu0 %v1201
    %1251 = vmatprep.subr.bf16.mxu0 0
    %1252 = vmatpush1.bf16.msra.mxu0 %v1202
    %1253 = vmatprep.subr.bf16.mxu0 0
    %1254 = vmatpush1.bf16.msra.mxu0 %v1203
    %1255 = vmatprep.subr.bf16.mxu0 0
    %1256 = vmatpush1.bf16.msra.mxu0 %v1204
    %1257 = vmatprep.subr.bf16.mxu0 0
    %1258 = vmatpush1.bf16.msra.mxu0 %v1205
    %1259 = vmatprep.subr.bf16.mxu0 0
    %1260 = vmatpush1.bf16.msra.mxu0 %v1206
    %1261 = vmatprep.subr.bf16.mxu0 0
    %1262 = vmatpush1.bf16.msra.mxu0 %v1207
    %1263 = vmatprep.subr.bf16.mxu0 0
    %1264 = vmatpush1.bf16.msra.mxu0 %v1208
    %1265 = vmatprep.subr.bf16.mxu0 0
    %1266 = vmatpush1.bf16.msra.mxu0 %v1209
    %1267 = vmatprep.subr.bf16.mxu0 0
    %1268 = vmatpush1.bf16.msra.mxu0 %v1210
    %1269 = vmatprep.subr.bf16.mxu0 0
    %1270 = vmatpush1.bf16.msra.mxu0 %v1211
    %1271 = vmatprep.subr.bf16.mxu0 0
    %1272 = vmatpush1.bf16.msra.mxu0 %v1212
    %1273 = vmatprep.subr.bf16.mxu0 0
    %1274 = vmatpush1.bf16.msra.mxu0 %v1213
    %1275 = vmatprep.subr.bf16.mxu0 0
    %1276 = vmatpush1.bf16.msra.mxu0 %v1214
    %1277 = vmatprep.subr.bf16.mxu0 0
    %1278 = vmatpush1.bf16.msra.mxu0 %v1215
    %1279 = vmatprep.subr.bf16.mxu0 0
    %1280 = vmatpush1.bf16.msra.mxu0 %v1216
    %1281 = vmatprep.mubr.bf16.mxu0 %v1048
    %1282 = vmatmul.mubr.bf16.gmra.mrb[0].mxu0 %v1047
    %v1283 = vpop.f32.mrb[0].mxu0
    %v1284 = vadd.f32 %v1103, %v1283
    %v1285 = vpop.f32.mrb[0].mxu0
    %v1286 = vpop.f32.mrb[0].mxu0
    %v1287 = vpop.f32.mrb[0].mxu0
    %1288 = vdwg.mxu0
    %1289 = vmatprep.subr.bf16.mxu0 0
    %1290 = vmatpush1.bf16.msra.mxu0 %v1217
    %1291 = vmatprep.subr.bf16.mxu0 0
    %1292 = vmatpush1.bf16.msra.mxu0 %v1218
    %1293 = vmatprep.subr.bf16.mxu0 0
    %1294 = vmatpush1.bf16.msra.mxu0 %v1219
    %1295 = vmatprep.subr.bf16.mxu0 0
    %1296 = vmatpush1.bf16.msra.mxu0 %v1220
    %1297 = vmatprep.subr.bf16.mxu0 0
    %1298 = vmatpush1.bf16.msra.mxu0 %v1221
    %1299 = vmatprep.subr.bf16.mxu0 0
    %1300 = vmatpush1.bf16.msra.mxu0 %v1222
    %1301 = vmatprep.subr.bf16.mxu0 0
    %1302 = vmatpush1.bf16.msra.mxu0 %v1223
    %1303 = vmatprep.subr.bf16.mxu0 0
    %1304 = vmatpush1.bf16.msra.mxu0 %v1224
    %1305 = vmatprep.subr.bf16.mxu0 0
    %1306 = vmatpush1.bf16.msra.mxu0 0
    %1307 = vmatprep.subr.bf16.mxu0 0
    %1308 = vmatpush1.bf16.msra.mxu0 0
    %1309 = vmatprep.subr.bf16.mxu0 0
    %1310 = vmatpush1.bf16.msra.mxu0 0
    %1311 = vmatprep.subr.bf16.mxu0 0
    %1312 = vmatpush1.bf16.msra.mxu0 0
    %1313 = vmatprep.subr.bf16.mxu0 0
    %1314 = vmatpush1.bf16.msra.mxu0 0
    %1315 = vmatprep.subr.bf16.mxu0 0
    %1316 = vmatpush1.bf16.msra.mxu0 0
    %1317 = vmatprep.subr.bf16.mxu0 0
    %1318 = vmatpush1.bf16.msra.mxu0 0
    %1319 = vmatprep.subr.bf16.mxu0 0
    %1320 = vmatpush1.bf16.msra.mxu0 0
    %1321 = vmatprep.mubr.bf16.mxu0 0
    %1322 = vmatmul.mubr.bf16.gmra.mrb[0].mxu0 %v1049
    %v1323 = vpop.f32.mrb[0].mxu0
    %v1324 = vadd.f32 %v1284, %v1323
    %v1325 = vpop.f32.mrb[0].mxu0
    %v1326 = vpop.f32.mrb[0].mxu0
    %v1327 = vpop.f32.mrb[0].mxu0
    %1328 = vdwg.mxu0
    %v1329 = vtanh.pop %v1324
    %v1330 = vstv %s82
    %v1331 = vmul.f32 %v1329, %v1330
    %1332 = vst [vmem:[%s8] sm:$0xff] %v1331
    // Predicated region
    $region50: #{actor_forward.1} parent=1 // pred_check
      _
    $region51: #{actor_forward.1} parent=1 // pred_check_branch
      %1334 = sbr.rel (0) target = $region53
    $region52: #{actor_forward.1} parent=1 // pred_region
      _
    $region53: #{actor_forward.1} parent=1 // pred_fallthru
      _
    // Predicated region
    $region54: #{actor_forward.1} parent=1 // pred_check
      _
    $region55: #{actor_forward.1} parent=1 // pred_check_branch
      %1336 = sbr.rel (0) target = $region57
    $region56: #{actor_forward.1} parent=1 // pred_region
      _
    $region57: #{actor_forward.1} parent=1 // pred_fallthru
      _
    %1337 = vsyncpa [#allocation4], 1
    %1338 = vsyncpa [#allocation6], 1
    %1339 = vsyncpa [#allocation9], 1

</llo_original>
